<compile_context>
chip_gen: v6e
topology: v6e:2x2x1
jax: 0.10.0
libtpu: 0.0.40
codegen_flags: <defaults>
</compile_context>

<pallas_src>
import jax
import jax.numpy as jnp
import numpy as np
from jax import lax
from jax.experimental import pallas as pl
from jax.experimental.pallas import tpu as pltpu


def conv_bn_silu_kernel(x_ref, w_ref, b_ref, o_ref):
    """Fused 1x1-conv + folded (eval) BatchNorm + SiLU.

    x_ref: (Bt, C1, HWt)  bf16, lane-dense flattened-spatial input block
    w_ref: (C2, C1)       bf16, conv weight with the BN scale pre-folded in
    b_ref: (C2, 1)        f32, BN shift (per-channel bias)
    o_ref: (Bt, C2, HWt)  output block (original dtype)
    """
    w = w_ref[...]            # loaded once per grid step
    b = b_ref[...]            # (C2, 1), broadcast exactly once below
    bt = x_ref.shape[0]

    if bt == 1:
        # Plain 2-D MXU matmul: (C2, C1) x (C1, HWt) -> (C2, HWt), f32 acc.
        y = jnp.dot(w, x_ref[0], preferred_element_type=jnp.float32)
        y = y + b
        # SiLU: exp and reciprocal both go to the EUP slot.
        o_ref[0] = (y * pl.reciprocal(1.0 + jnp.exp(-y), approx=True)).astype(o_ref.dtype)
    else:
        # Single batched dot_general instead of an unrolled Python loop:
        # keeps the weight staged in the MXU and bounds vreg live ranges.
        wb = jnp.broadcast_to(w, (bt,) + w.shape)            # hoisted, once per step
        y = lax.dot_general(
            wb, x_ref[...],
            dimension_numbers=(((2,), (1,)), ((0,), (0,))),
            preferred_element_type=jnp.float32)              # (Bt, C2, HWt) f32
        y = y + b                                            # (C2,1) -> broadcast once
        o_ref[...] = (y * pl.reciprocal(1.0 + jnp.exp(-y), approx=True)).astype(o_ref.dtype)


def _choose_tiling(B, C1, HW_pad, x_itemsize,
                   target_block_bytes=2 << 20, max_lanes=2048, min_steps=4):
    """Pick (Bt, HWt) so the x block stays within the byte budget, HWt is a
    lane-dense multiple of 128, and the grid has enough steps to pipeline and
    feed both v7x TensorCores."""
    hw_divs = [d for d in range(128, HW_pad + 1, 128) if HW_pad % d == 0]

    # Largest lane tile within lane / byte budget.
    hwt = hw_divs[0]
    for d in hw_divs:
        if d <= max_lanes and C1 * d * x_itemsize <= target_block_bytes:
            hwt = d

    # Largest batch tile that still fits the budget.
    bt = 1
    for d in range(1, B + 1):
        if B % d == 0 and d * C1 * hwt * x_itemsize <= target_block_bytes:
            bt = d

    def steps(bt_, hwt_):
        return (B // bt_) * (HW_pad // hwt_)

    # Ensure several pipelined steps (megacore + DMA/compute overlap).
    while steps(bt, hwt) < min_steps:
        if bt > 1:
            nb = bt - 1
            while B % nb:
                nb -= 1
            bt = nb
        else:
            smaller = [d for d in hw_divs if d < hwt]
            if not smaller:
                break
            hwt = smaller[-1]
    return bt, hwt


def conv_bn_silu_pallas(x, w, gamma, beta, run_mean, run_var, eps=1e-5):
    B, C1, H, W = x.shape
    C2 = w.shape[0]
    assert w.shape[1] == C1 and w.shape[2] == 1 and w.shape[3] == 1, (
        "only the default 1x1 / stride-1 / groups-1 Conv path is implemented")

    out_dtype = x.dtype
    HW = H * W
    HW_pad = ((HW + 127) // 128) * 128            # lane-dense output stores

    # --- fold eval-mode BN into the conv weight + a per-channel bias ---------
    inv_std = 1.0 / jnp.sqrt(run_var.astype(jnp.float32) + eps)
    scale = gamma.astype(jnp.float32) * inv_std                               # (C2,)
    w_folded = (w.reshape(C2, C1).astype(jnp.float32) * scale[:, None]
                ).astype(jnp.bfloat16)                                        # MXU dtype
    bias = (beta.astype(jnp.float32)
            - run_mean.astype(jnp.float32) * scale).reshape(C2, 1)            # stays f32

    # Lane-dense flattening + padding of the spatial dims; bf16 matmul operand.
    x_flat = x.reshape(B, C1, HW)
    if HW_pad != HW:
        x_flat = jnp.pad(x_flat, ((0, 0), (0, 0), (0, HW_pad - HW)))
    x_flat = x_flat.astype(jnp.bfloat16)

    x_itemsize = 2
    out_itemsize = jnp.dtype(out_dtype).itemsize
    bt, hwt = _choose_tiling(B, C1, HW_pad, x_itemsize)
    grid = (B // bt, HW_pad // hwt)

    # VMEM actually needed (double-buffered blocks + resident weight/bias),
    # with headroom — never request the full 64 MiB of a v7x TensorCore.
    x_blk_bytes = bt * C1 * hwt * x_itemsize
    o_blk_bytes = bt * C2 * hwt * out_itemsize
    w_bytes = C2 * C1 * 2
    b_bytes = C2 * 4
    vmem_need = 2 * (x_blk_bytes + o_blk_bytes) + 2 * (w_bytes + b_bytes)
    vmem_limit = int(min(2 * vmem_need + (2 << 20), 32 * 1024 * 1024))

    out_flat = pl.pallas_call(
        conv_bn_silu_kernel,
        out_shape=jax.ShapeDtypeStruct((B, C2, HW_pad), out_dtype),
        grid_spec=pltpu.PrefetchScalarGridSpec(
            num_scalar_prefetch=0,
            grid=grid,
            in_specs=[
                pl.BlockSpec((bt, C1, hwt), lambda i, j: (i, 0, j)),   # x (lane-dense)
                pl.BlockSpec((C2, C1), lambda i, j: (0, 0)),           # folded weight
                pl.BlockSpec((C2, 1), lambda i, j: (0, 0)),            # BN shift
            ],
            out_specs=pl.BlockSpec((bt, C2, hwt), lambda i, j: (i, 0, j)),
        ),
        compiler_params=pltpu.CompilerParams(
            dimension_semantics=("parallel", "parallel"),   # megacore sharding
            vmem_limit_bytes=vmem_limit,
        ),
    )(x_flat, w_folded, bias)

    return out_flat[:, :, :HW].reshape(B, C2, H, W)


def conv_bn_silu_ref(x, w, gamma, beta, run_mean, run_var, eps=1e-5):
    """Pure-JAX reference mirroring the PyTorch forward (eval-mode BN, SiLU)."""
    B, C1, H, W = x.shape
    C2 = w.shape[0]
    y = jnp.einsum("oc,bchw->bohw", w.reshape(C2, C1), x)       # 1x1 conv, bias=False
    y = (y - run_mean[None, :, None, None]) / jnp.sqrt(run_var[None, :, None, None] + eps)
    y = y * gamma[None, :, None, None] + beta[None, :, None, None]
    return y * jax.nn.sigmoid(y)                                # SiLU


if __name__ == "__main__":
    B, C1, C2, H, W = 2, 64, 64, 16, 16   # H*W = 256 -> lane-dense blocks

    key = jax.random.PRNGKey(0)
    kx, kw, kg, kb, km, kv = jax.random.split(key, 6)

    x = jax.random.normal(kx, (B, C1, H, W), dtype=jnp.float32)
    # PyTorch-style Conv2d weight (c2, c1, 1, 1), bias=False
    w = jax.random.normal(kw, (C2, C1, 1, 1), dtype=jnp.float32) * 0.1
    # deterministic BatchNorm parameters / running stats (eval mode)
    gamma = 1.0 + 0.1 * jax.random.normal(kg, (C2,), dtype=jnp.float32)
    beta = 0.1 * jax.random.normal(kb, (C2,), dtype=jnp.float32)
    run_mean = 0.1 * jax.random.normal(km, (C2,), dtype=jnp.float32)
    run_var = jnp.abs(1.0 + 0.1 * jax.random.normal(kv, (C2,), dtype=jnp.float32))

    out = conv_bn_silu_pallas(x, w, gamma, beta, run_mean, run_var)
    out = jax.block_until_ready(out)

    ref = conv_bn_silu_ref(x, w, gamma, beta, run_mean, run_var)
    # bf16 matmul operands (per the perf review) -> loosened tolerance vs f32 ref
    np.testing.assert_allclose(np.asarray(out), np.asarray(ref), rtol=3e-2, atol=3e-2)

    print("KERNEL_OK")
</pallas_src>

<mosaic_0001>
module attributes {stable_mosaic.version = 11 : i64} {
  func.func @conv_bn_silu_kernel(%arg0: i32, %arg1: i32, %arg2: memref<1x64x128xbf16, #tpu.memory_space<vmem>>, %arg3: memref<64x64xbf16, #tpu.memory_space<vmem>>, %arg4: memref<64x1xf32, #tpu.memory_space<vmem>>, %arg5: memref<1x64x128xf32, #tpu.memory_space<vmem>>) attributes {dimension_semantics = [#tpu.dimension_semantics<parallel>, #tpu.dimension_semantics<parallel>], iteration_bounds = array<i64: 2, 2>, scalar_prefetch = 0 : i64, scratch_operands = 0 : i64, tpu.core_type = #tpu.core_type<tc>, window_params = [{transform_indices = @transform_0, window_bounds = array<i64: 1, 64, 128>}, {pipeline_mode = #tpu.pipeline_mode<synchronous>, transform_indices = @transform_1, window_bounds = array<i64: 64, 64>}, {pipeline_mode = #tpu.pipeline_mode<synchronous>, transform_indices = @transform_2, window_bounds = array<i64: 64, 1>}, {transform_indices = @transform_3, window_bounds = array<i64: 1, 64, 128>}]} {
    %c0 = arith.constant 0 : index
    %c0_0 = arith.constant 0 : index
    %0 = vector.load %arg3[%c0, %c0_0] : memref<64x64xbf16, #tpu.memory_space<vmem>>, vector<64x64xbf16>
    %c0_1 = arith.constant 0 : index
    %c0_2 = arith.constant 0 : index
    %1 = vector.load %arg4[%c0_1, %c0_2] : memref<64x1xf32, #tpu.memory_space<vmem>>, vector<64x1xf32>
    %c0_3 = arith.constant 0 : index
    %c0_4 = arith.constant 0 : index
    %c0_5 = arith.constant 0 : index
    %2 = vector.load %arg2[%c0_3, %c0_4, %c0_5] : memref<1x64x128xbf16, #tpu.memory_space<vmem>>, vector<1x64x128xbf16>
    %3 = vector.shape_cast %2 : vector<1x64x128xbf16> to vector<64x128xbf16>
    %cst = arith.constant dense<0.000000e+00> : vector<64x128xf32>
    %4 = tpu.matmul %0, %3, %cst {dimension_numbers = #tpu.dot_dimension_numbers<[1], [0], [0], [1], [0, 0, 1, 1], [], []>} : vector<64x64xbf16>, vector<64x128xbf16>, vector<64x128xf32> -> vector<64x128xf32>
    %5 = vector.broadcast %1 : vector<64x1xf32> to vector<64x128xf32>
    %6 = arith.addf %4, %5 : vector<64x128xf32>
    %cst_6 = arith.constant 0.000000e+00 : f32
    %7 = vector.broadcast %cst_6 : f32 to vector<64x128xf32>
    %8 = arith.subf %7, %6 : vector<64x128xf32>
    %9 = math.exp %8 : vector<64x128xf32>
    %cst_7 = arith.constant 1.000000e+00 : f32
    %10 = vector.broadcast %cst_7 : f32 to vector<64x128xf32>
    %11 = arith.addf %10, %9 : vector<64x128xf32>
    %12 = tpu.reciprocal %11 {approx = true} : vector<64x128xf32> -> vector<64x128xf32>
    %13 = arith.mulf %6, %12 : vector<64x128xf32>
    %c0_8 = arith.constant 0 : index
    %c0_9 = arith.constant 0 : index
    %c0_10 = arith.constant 0 : index
    %14 = vector.load %arg5[%c0_8, %c0_9, %c0_10] : memref<1x64x128xf32, #tpu.memory_space<vmem>>, vector<1x64x128xf32>
    %15 = vector.shape_cast %14 : vector<1x64x128xf32> to vector<64x128xf32>
    %16 = vector.shape_cast %13 : vector<64x128xf32> to vector<1x64x128xf32>
    tpu.vector_store %arg5[%c0_8, %c0_9, %c0_10], %16 {strides = array<i32>} : memref<1x64x128xf32, #tpu.memory_space<vmem>>, vector<1x64x128xf32>,
    return
  }
  func.func @transform_0(%arg0: i32, %arg1: i32) -> (i32, i32, i32) {
    %c0_i32 = arith.constant 0 : i32
    %c0_i32_0 = arith.constant 0 : i32
    return %arg0, %c0_i32, %arg1 : i32, i32, i32
  }
  func.func @transform_1(%arg0: i32, %arg1: i32) -> (i32, i32) {
    %c0_i32 = arith.constant 0 : i32
    %c0_i32_0 = arith.constant 0 : i32
    %c0_i32_1 = arith.constant 0 : i32
    return %c0_i32, %c0_i32_0 : i32, i32
  }
  func.func @transform_2(%arg0: i32, %arg1: i32) -> (i32, i32) {
    %c0_i32 = arith.constant 0 : i32
    %c0_i32_0 = arith.constant 0 : i32
    %c0_i32_1 = arith.constant 0 : i32
    return %c0_i32, %c0_i32_0 : i32, i32
  }
  func.func @transform_3(%arg0: i32, %arg1: i32) -> (i32, i32, i32) {
    %c0_i32 = arith.constant 0 : i32
    %c0_i32_0 = arith.constant 0 : i32
    return %arg0, %c0_i32, %arg1 : i32, i32, i32
  }
}

</mosaic_0001>

<llo_original>
// kernel: tpu_custom_call.1
$region0: #{tpu_custom_call.1}
  #allocation0 [shape = 'u32[]', space=smem, size = 0x4, offset = 0x4, fixed_abs, tag = 'smem constant byte address 0x4 - core index']
  #allocation1 [shape = 'u32[144,128]{1,0:T(1,128)}', space=vmem, size = 0x12000, scoped, tag = 'internal scratch']
  %s0 = inlined_call_operand.hbm [shape: bf16[2,64,256], index: 0, kind: input, shape index: {}]
  %s1 = inlined_call_operand.vmem [shape: bf16[64,64], index: 1, kind: input, shape index: {}]
  %s2 = inlined_call_operand.vmem [shape: f32[64,1], index: 2, kind: input, shape index: {}]
  %s3 = inlined_call_operand.hbm [shape: f32[2,64,256], index: 3, kind: output, shape index: {}]
  %s4 = sld [smem:[#allocation0]]
  $region49: #{tpu_custom_call.1} parent=0
    _
  %s6 = ssub.s32 1, %s4
  %s7 = scalar_select 0, %s6, %s4
  $region1: #{tpu_custom_call.1} parent=0
    #allocation2 [shape = 'u8[32768]{0}', space=vmem, size = 0x8000, scoped, tag = 'input window, operand 0']
    #allocation3 [shape = 's32[2]{0}', space=sflag, size = 0x8, scoped, tag = 'scoped memory for tpu_custom_call.1']
    #allocation4 [shape = 's32[2]{0}', space=sflag, size = 0x8, scoped, tag = 'scoped memory for tpu_custom_call.1']
    #allocation5 [shape = 'u8[65536]{0}', space=vmem, size = 0x10000, scoped, tag = 'output window, operand 0']
    %8 = vsyncpa [#allocation3], 0
    %s9 = scalar_lea.sflag [#allocation3], 1
    %10 = vsyncpa %s9, 0
    %11 = vsyncpa [#allocation4], 0
    %s12 = scalar_lea.sflag [#allocation4], 1
    %13 = vsyncpa %s12, 0
    loop: start=0, step=1, limit=6
    $region2: #{tpu_custom_call.1} parent=1 // loop_pre_header
      _
    $region3: #{tpu_custom_call.1} parent=1 // loop_header
      %s15 = sphi 0, %s19
      %p16 = scmp.ge.s32.totalorder %s15, 6
      %s22 = sphi 0, %s34
      %s23 = sphi 0, %s30
      %s24 = sphi 0, %s22
      %s25 = sphi 0, %s23
      %s26 = sphi 0, %s24
      %s27 = sphi 0, %s25
      %s39 = sphi 0, %s41
      %s42 = sphi 0, %s39
      %s43 = sphi 0, %s42
      %s59 = sphi 0, %s43
      %s63 = sphi 0, %s63
      %s65 = sphi 0, %s63
      %s66 = sphi 0, %s65
      %s80 = sphi 0, %s66
      %s84 = sphi 0, %s84
      %s86 = sphi 0, %s84
      %s87 = sphi 0, %s86
      %s101 = sphi 0, %s87
      %s109 = sphi 0, %s111
      %s112 = sphi 0, %s109
      %s113 = sphi 0, %s112
      %s129 = sphi 0, %s113
    $region4: #{tpu_custom_call.1} parent=1 // loop_header_branch
      %18 = sbr.rel (%p16) target = $region8
    $region5: #{tpu_custom_call.1} parent=1 // loop_body
      %s20 = ssub.s32 %s15, 1
      %s21 = ssub.s32 %s15, 2
      %s28 = sadd.s32 1, %s23
      %p29 = scmp.ge.s32.totalorder %s28, 2
      %s30 = scalar_select %p29, 0, %s28
      %s31 = sadd.s32 1, %s22
      %s32 = scalar_select %p29, %s31, %s22
      %p33 = scmp.ge.s32.totalorder %s32, 2
      %s34 = scalar_select %p33, 0, %s32
      %s35 = ssub.s32 %s22, %s34
      %s36 = ssub.s32 %s23, %s30
      %s37 = sor.u32 %s35, %s36
      %p38 = scmp.eq.s32.totalorder %s37, 0
      %s40 = sadd.s32 %s39, 1
      %s41 = scalar_select %p38, %s39, %s40
      %p44 = pneg %p38
      %p45 = scmp.eq.s32.totalorder %s15, 3
      %p46 = por %p44, %p45
      %p47 = scmp.ne.s32.totalorder %s39, %s42
      %p48 = scmp.eq.s32.totalorder %s15, 0
      %p49 = por %p47, %p48
      %p50 = scmp.ne.s32.totalorder %s39, %s42
      %p51 = scmp.eq.s32.totalorder %s20, 3
      %p52 = por %p50, %p51
      %p53 = scmp.ne.s32.totalorder %s42, %s43
      %p54 = scmp.eq.s32.totalorder %s20, 0
      %p55 = por %p53, %p54
      %p56 = scmp.ne.s32.totalorder %s42, %s43
      %p57 = scmp.eq.s32.totalorder %s21, 3
      %p58 = por %p56, %p57
      %p60 = scmp.ne.s32.totalorder %s43, %s59
      %p61 = scmp.eq.s32.totalorder %s21, 0
      %p62 = por %p60, %p61
      %s64 = sadd.s32 %s63, 1
      %p67 = scmp.eq.s32.totalorder %s15, 3
      %p68 = scmp.ne.s32.totalorder %s63, %s65
      %p69 = scmp.eq.s32.totalorder %s15, 0
      %p70 = por %p68, %p69
      %p71 = scmp.ne.s32.totalorder %s63, %s65
      %p72 = scmp.eq.s32.totalorder %s20, 3
      %p73 = por %p71, %p72
      %p74 = scmp.ne.s32.totalorder %s65, %s66
      %p75 = scmp.eq.s32.totalorder %s20, 0
      %p76 = por %p74, %p75
      %p77 = scmp.ne.s32.totalorder %s65, %s66
      %p78 = scmp.eq.s32.totalorder %s21, 3
      %p79 = por %p77, %p78
      %p81 = scmp.ne.s32.totalorder %s66, %s80
      %p82 = scmp.eq.s32.totalorder %s21, 0
      %p83 = por %p81, %p82
      %s85 = sadd.s32 %s84, 1
      %p88 = scmp.eq.s32.totalorder %s15, 3
      %p89 = scmp.ne.s32.totalorder %s84, %s86
      %p90 = scmp.eq.s32.totalorder %s15, 0
      %p91 = por %p89, %p90
      %p92 = scmp.ne.s32.totalorder %s84, %s86
      %p93 = scmp.eq.s32.totalorder %s20, 3
      %p94 = por %p92, %p93
      %p95 = scmp.ne.s32.totalorder %s86, %s87
      %p96 = scmp.eq.s32.totalorder %s20, 0
      %p97 = por %p95, %p96
      %p98 = scmp.ne.s32.totalorder %s86, %s87
      %p99 = scmp.eq.s32.totalorder %s21, 3
      %p100 = por %p98, %p99
      %p102 = scmp.ne.s32.totalorder %s87, %s101
      %p103 = scmp.eq.s32.totalorder %s21, 0
      %p104 = por %p102, %p103
      %s105 = ssub.s32 %s22, %s34
      %s106 = ssub.s32 %s23, %s30
      %s107 = sor.u32 %s105, %s106
      %p108 = scmp.eq.s32.totalorder %s107, 0
      %s110 = sadd.s32 %s109, 1
      %s111 = scalar_select %p108, %s109, %s110
      %p114 = pneg %p108
      %p115 = scmp.eq.s32.totalorder %s15, 3
      %p116 = por %p114, %p115
      %p117 = scmp.ne.s32.totalorder %s109, %s112
      %p118 = scmp.eq.s32.totalorder %s15, 0
      %p119 = por %p117, %p118
      %p120 = scmp.ne.s32.totalorder %s109, %s112
      %p121 = scmp.eq.s32.totalorder %s20, 3
      %p122 = por %p120, %p121
      %p123 = scmp.ne.s32.totalorder %s112, %s113
      %p124 = scmp.eq.s32.totalorder %s20, 0
      %p125 = por %p123, %p124
      %p126 = scmp.ne.s32.totalorder %s112, %s113
      %p127 = scmp.eq.s32.totalorder %s21, 3
      %p128 = por %p126, %p127
      %p130 = scmp.ne.s32.totalorder %s113, %s129
      %p131 = scmp.eq.s32.totalorder %s21, 0
      %p132 = por %p130, %p131
      %p133 = scmp.le.s32.totalorder 1, %s15
      %p134 = scmp.lt.s32.totalorder %s15, 5
      %p135 = pnand %p133, %p134
      %p136 = pneg %p135
      // Predicated region
      $region9: #{tpu_custom_call.1} parent=5 // pred_check
        _
      $region10: #{tpu_custom_call.1} parent=5 // pred_check_branch
        %138 = sbr.rel (%p135) target = $region12
      $region11: #{tpu_custom_call.1} parent=5 // pred_region
        %s139 = ssub.s32 %s15, 1
        // Predicated region
        $region13: #{tpu_custom_call.1} parent=11 // pred_check
          %p140 = pneg %p76
        $region14: #{tpu_custom_call.1} parent=11 // pred_check_branch
          %142 = sbr.rel (%p140) target = $region16
        $region15: #{tpu_custom_call.1} parent=11 // pred_region
          _
        $region16: #{tpu_custom_call.1} parent=11 // pred_fallthru
          _
        // Predicated region
        $region17: #{tpu_custom_call.1} parent=11 // pred_check
          %p143 = pneg %p97
        $region18: #{tpu_custom_call.1} parent=11 // pred_check_branch
          %145 = sbr.rel (%p143) target = $region20
        $region19: #{tpu_custom_call.1} parent=11 // pred_region
          _
        $region20: #{tpu_custom_call.1} parent=11 // pred_fallthru
          _
      $region12: #{tpu_custom_call.1} parent=5 // pred_fallthru
        _
      %p146 = scmp.lt.s32.totalorder %s15, 4
      // Predicated region
      $region21: #{tpu_custom_call.1} parent=5 // pred_check
        %p147 = pneg %p146
      $region22: #{tpu_custom_call.1} parent=5 // pred_check_branch
        %149 = sbr.rel (%p147) target = $region24
      $region23: #{tpu_custom_call.1} parent=5 // pred_region
        // Predicated region
        $region25: #{tpu_custom_call.1} parent=23 // pred_check
          %p150 = pneg %p49
        $region26: #{tpu_custom_call.1} parent=23 // pred_check_branch
          %152 = sbr.rel (%p150) target = $region28
        $region27: #{tpu_custom_call.1} parent=23 // pred_region
          %s153 = sand.u32 %s39, 1
          %s154 = scalar_lea.sflag [#allocation3], %s153
          %s155 = sand.u32 %s39, 1
          %s156 = smul.addr %s155, 32
          %s157 = scalar_lea.vmem [#allocation2], %s156
          %s159 = ssub.s32 512, 512
          %160 = vsyncadd %s154, %s159
          %s161 = smul.addr %s22, 16
          %s162 = sadd.s32 %s23, %s161
          %s163 = smul.addr %s162, 64
          %s164 = scalar_lea.hbm %s0, %s163
          %s165 = sshll.u32 %s157, 4
          %s166 = int_to_ptr.vmem [resolvable:$true] %s165
          %171 = dma.hbm_to_vmem [thread:$0]  %s164, 512, %s166, %s154, 128, 64, 4
        $region28: #{tpu_custom_call.1} parent=23 // pred_fallthru
          _
      $region24: #{tpu_custom_call.1} parent=5 // pred_fallthru
        _
      %p172 = scmp.le.s32.totalorder 1, %s15
      %p173 = scmp.lt.s32.totalorder %s15, 5
      %p174 = pnand %p172, %p173
      %p175 = pneg %p174
      // Predicated region
      $region29: #{tpu_custom_call.1} parent=5 // pred_check
        _
      $region30: #{tpu_custom_call.1} parent=5 // pred_check_branch
        %177 = sbr.rel (%p174) target = $region32
      $region31: #{tpu_custom_call.1} parent=5 // pred_region
        %s178 = ssub.s32 %s15, 1
        %s179 = sand.u32 %s42, 1
        %s180 = scalar_lea.sflag [#allocation3], %s179
        %s181 = sand.u32 %s42, 1
        %s182 = smul.addr %s181, 32
        %s183 = scalar_lea.vmem [#allocation2], %s182
        // Predicated region
        $region33: #{tpu_custom_call.1} parent=31 // pred_check
          %p184 = pneg %p55
        $region34: #{tpu_custom_call.1} parent=31 // pred_check_branch
          %186 = sbr.rel (%p184) target = $region36
        $region35: #{tpu_custom_call.1} parent=31 // pred_region
          %187 = dma.done %s180, 512
        $region36: #{tpu_custom_call.1} parent=31 // pred_fallthru
          _
        %s188 = sand.u32 %s42, 1
        %s189 = scalar_lea.sflag [#allocation3], %s188
        %s190 = sand.u32 %s42, 1
        %s191 = smul.addr %s190, 32
        %s192 = scalar_lea.vmem [#allocation2], %s191
        %p193 = pneg %p55
        %p194 = pneg %p52
        %p195 = pneg %p76
        %p196 = pneg %p73
        %p197 = pneg %p97
        %p198 = pneg %p94
        %p199 = pneg %p125
        %p200 = pneg %p122
        %s201 = sand.u32 %s112, 1
        %s202 = scalar_lea.sflag [#allocation4], %s201
        %s203 = sand.u32 %s112, 1
        %s204 = smul.addr %s203, 64
        %s205 = scalar_lea.vmem [#allocation5], %s204
        %v207 = vld [vmem:[%s1] sm:$0xf]
        %v208 = vld [vmem:[%s1 + $0x4] sm:$0xf]
        %v209 = vld [vmem:[%s1 + $0x8] sm:$0xf]
        %v210 = vld [vmem:[%s1 + $0xc] sm:$0xf]
        %v211 = vld [vmem:[%s1 + $0x10] sm:$0xf]
        %v212 = vld [vmem:[%s1 + $0x14] sm:$0xf]
        %v213 = vld [vmem:[%s1 + $0x18] sm:$0xf]
        %v214 = vld [vmem:[%s1 + $0x1c] sm:$0xf]
        %v215 = vld [vmem:[%s2] sm:$0xff]
        %v216 = vld [vmem:[%s2 + $0x8] sm:$0xff]
        %v217 = vld [vmem:[%s2 + $0x10] sm:$0xff]
        %v218 = vld [vmem:[%s2 + $0x18] sm:$0xff]
        %v219 = vld [vmem:[%s2 + $0x20] sm:$0xff]
        %v220 = vld [vmem:[%s2 + $0x28] sm:$0xff]
        %v221 = vld [vmem:[%s2 + $0x30] sm:$0xff]
        %v222 = vld [vmem:[%s2 + $0x38] sm:$0xff]
        %v223 = vld [vmem:[%s183] sm:$0xf]
        %v224 = vld [vmem:[%s183 + $0x4] sm:$0xf]
        %v225 = vld [vmem:[%s183 + $0x8] sm:$0xf]
        %v226 = vld [vmem:[%s183 + $0xc] sm:$0xf]
        %v227 = vld [vmem:[%s183 + $0x10] sm:$0xf]
        %v228 = vld [vmem:[%s183 + $0x14] sm:$0xf]
        %v229 = vld [vmem:[%s183 + $0x18] sm:$0xf]
        %v230 = vld [vmem:[%s183 + $0x1c] sm:$0xf]
        %232 = vset.pattern.permute.xlu0 0
        %233 = vperm.xlu0 %232, %v215
        %v234 = vpop.permute.xlu0 %233
        %237 = vset.pattern.permute.xlu0 0
        %238 = vperm.xlu0 %237, %v216
        %v239 = vpop.permute.xlu0 %238
        %242 = vset.pattern.permute.xlu0 0
        %243 = vperm.xlu0 %242, %v217
        %v244 = vpop.permute.xlu0 %243
        %247 = vset.pattern.permute.xlu0 0
        %248 = vperm.xlu0 %247, %v218
        %v249 = vpop.permute.xlu0 %248
        %252 = vset.pattern.permute.xlu0 0
        %253 = vperm.xlu0 %252, %v219
        %v254 = vpop.permute.xlu0 %253
        %257 = vset.pattern.permute.xlu0 0
        %258 = vperm.xlu0 %257, %v220
        %v259 = vpop.permute.xlu0 %258
        %262 = vset.pattern.permute.xlu0 0
        %263 = vperm.xlu0 %262, %v221
        %v264 = vpop.permute.xlu0 %263
        %267 = vset.pattern.permute.xlu0 0
        %268 = vperm.xlu0 %267, %v222
        %v269 = vpop.permute.xlu0 %268
        %v279 = vunpack.c.l.b16 %v207
        %v280 = vunpack.c.l.b16 %v208
        %v281 = vunpack.c.l.b16 %v209
        %v282 = vunpack.c.l.b16 %v210
        %v283 = vunpack.c.l.b16 %v211
        %v284 = vunpack.c.l.b16 %v212
        %v285 = vunpack.c.l.b16 %v213
        %v286 = vunpack.c.l.b16 %v214
        %v287 = vpack.c.b16 %v280, %v279
        %v288 = vpack.c.b16 %v282, %v281
        %v289 = vpack.c.b16 %v284, %v283
        %v290 = vpack.c.b16 %v286, %v285
        %v299 = vunpack.c.l.b16 %v223
        %v300 = vunpack.c.l.b16 %v224
        %v301 = vunpack.c.l.b16 %v225
        %v302 = vunpack.c.l.b16 %v226
        %v303 = vunpack.c.l.b16 %v227
        %v304 = vunpack.c.l.b16 %v228
        %v305 = vunpack.c.l.b16 %v229
        %v306 = vunpack.c.l.b16 %v230
        %v307 = vpack.c.b16 %v300, %v299
        %v308 = vpack.c.b16 %v302, %v301
        %v309 = vpack.c.b16 %v304, %v303
        %v310 = vpack.c.b16 %v306, %v305
        %vm315 = vcmask 523264
        %v317 = vsel %vm315, %v287, 0
        %v320 = vsel %vm315, %v288, 0
        %v323 = vsel %vm315, %v289, 0
        %v326 = vsel %vm315, %v290, 0
        %328 = vmatprep.subr.bf16.mxu0 0
        %329 = vmatpush1.bf16.msra.mxu0 0
        %330 = vmatprep.subr.bf16.mxu0 0
        %331 = vmatpush1.bf16.msra.mxu0 0
        %332 = vmatprep.subr.bf16.mxu0 0
        %333 = vmatpush1.bf16.msra.mxu0 0
        %334 = vmatprep.subr.bf16.mxu0 0
        %335 = vmatpush1.bf16.msra.mxu0 0
        %336 = vmatprep.subr.bf16.mxu0 0
        %337 = vmatpush1.bf16.msra.mxu0 %v310
        %338 = vmatprep.subr.bf16.mxu0 0
        %339 = vmatpush1.bf16.msra.mxu0 %v309
        %340 = vmatprep.subr.bf16.mxu0 0
        %341 = vmatpush1.bf16.msra.mxu0 %v308
        %342 = vmatprep.subr.bf16.mxu0 0
        %343 = vmatpush1.bf16.msra.mxu0 %v307
        %344 = vmatprep.subr.bf16.mxu0 0
        %345 = vmatpush2.bf16.msra.mxu0 0
        %346 = vmatprep.subr.bf16.mxu0 0
        %347 = vmatpush2.bf16.msra.mxu0 0
        %348 = vmatprep.subr.bf16.mxu0 0
        %349 = vmatpush2.bf16.msra.mxu0 0
        %350 = vmatprep.subr.bf16.mxu0 0
        %351 = vmatpush2.bf16.msra.mxu0 0
        %352 = vmatprep.subr.bf16.mxu0 0
        %353 = vmatpush2.bf16.msra.mxu0 0
        %354 = vmatprep.subr.bf16.mxu0 0
        %355 = vmatpush2.bf16.msra.mxu0 0
        %356 = vmatprep.subr.bf16.mxu0 0
        %357 = vmatpush2.bf16.msra.mxu0 0
        %358 = vmatprep.subr.bf16.mxu0 0
        %359 = vmatpush2.bf16.msra.mxu0 0
        %360 = vmatprep.mubr.bf16.mxu0 0
        %361 = vmatmul.mubr.bf16.gmra.mxu0 %v317
        %v362 = vpop.f32.mrf.mxu0
        %v363 = vadd.f32 %v234, %v362
        %v364 = vpop.f32.mrf.mxu0
        %v365 = vpop.f32.mrf.mxu0
        %v366 = vadd.f32 %v239, %v365
        %v367 = vpop.f32.mrf.mxu0
        %368 = vmatprep.mubr.bf16.mxu0 0
        %369 = vmatmul.mubr.bf16.gmra.mxu0 %v320
        %v370 = vpop.f32.mrf.mxu0
        %v371 = vadd.f32 %v244, %v370
        %v372 = vpop.f32.mrf.mxu0
        %v373 = vpop.f32.mrf.mxu0
        %v374 = vadd.f32 %v249, %v373
        %v375 = vpop.f32.mrf.mxu0
        %376 = vmatprep.mubr.bf16.mxu0 0
        %377 = vmatmul.mubr.bf16.gmra.mxu0 %v323
        %v378 = vpop.f32.mrf.mxu0
        %v379 = vadd.f32 %v254, %v378
        %v380 = vpop.f32.mrf.mxu0
        %v381 = vpop.f32.mrf.mxu0
        %v382 = vadd.f32 %v259, %v381
        %v383 = vpop.f32.mrf.mxu0
        %384 = vmatprep.mubr.bf16.mxu0 0
        %385 = vmatmul.mubr.bf16.gmra.mxu0 %v326
        %v386 = vpop.f32.mrf.mxu0
        %v387 = vadd.f32 %v264, %v386
        %v388 = vpop.f32.mrf.mxu0
        %v389 = vpop.f32.mrf.mxu0
        %v390 = vadd.f32 %v269, %v389
        %v391 = vpop.f32.mrf.mxu0
        %392 = vdwg.mxu0
        %v393 = vsub.f32 0.0, %v363
        %v394 = vsub.f32 0.0, %v366
        %v395 = vsub.f32 0.0, %v371
        %v396 = vsub.f32 0.0, %v374
        %v397 = vsub.f32 0.0, %v379
        %v398 = vsub.f32 0.0, %v382
        %v399 = vsub.f32 0.0, %v387
        %v400 = vsub.f32 0.0, %v390
        %v401 = vmul.f32 %v393, 1.442695
        %v402 = vpow.pop %v401
        %v403 = vmul.f32 %v394, 1.442695
        %v404 = vpow.pop %v403
        %v405 = vmul.f32 %v395, 1.442695
        %v406 = vpow.pop %v405
        %v407 = vmul.f32 %v396, 1.442695
        %v408 = vpow.pop %v407
        %v409 = vmul.f32 %v397, 1.442695
        %v410 = vpow.pop %v409
        %v411 = vmul.f32 %v398, 1.442695
        %v412 = vpow.pop %v411
        %v413 = vmul.f32 %v399, 1.442695
        %v414 = vpow.pop %v413
        %v415 = vmul.f32 %v400, 1.442695
        %v416 = vpow.pop %v415
        %v417 = vadd.f32 %v402, 1.0
        %v418 = vadd.f32 %v404, 1.0
        %v419 = vadd.f32 %v406, 1.0
        %v420 = vadd.f32 %v408, 1.0
        %v421 = vadd.f32 %v410, 1.0
        %v422 = vadd.f32 %v412, 1.0
        %v423 = vadd.f32 %v414, 1.0
        %v424 = vadd.f32 %v416, 1.0
        %v425 = vrcp.pop %v417
        %v426 = vrcp.pop %v418
        %v427 = vrcp.pop %v419
        %v428 = vrcp.pop %v420
        %v429 = vrcp.pop %v421
        %v430 = vrcp.pop %v422
        %v431 = vrcp.pop %v423
        %v432 = vrcp.pop %v424
        %v433 = vmul.f32 %v363, %v425
        %v434 = vmul.f32 %v366, %v426
        %v435 = vmul.f32 %v371, %v427
        %v436 = vmul.f32 %v374, %v428
        %v437 = vmul.f32 %v379, %v429
        %v438 = vmul.f32 %v382, %v430
        %v439 = vmul.f32 %v387, %v431
        %v440 = vmul.f32 %v390, %v432
        %441 = vst [vmem:[%s205] sm:$0xff] %v433
        %442 = vst [vmem:[%s205 + $0x8] sm:$0xff] %v434
        %443 = vst [vmem:[%s205 + $0x10] sm:$0xff] %v435
        %444 = vst [vmem:[%s205 + $0x18] sm:$0xff] %v436
        %445 = vst [vmem:[%s205 + $0x20] sm:$0xff] %v437
        %446 = vst [vmem:[%s205 + $0x28] sm:$0xff] %v438
        %447 = vst [vmem:[%s205 + $0x30] sm:$0xff] %v439
        %448 = vst [vmem:[%s205 + $0x38] sm:$0xff] %v440
        %s449 = sand.u32 %s112, 1
        %s450 = scalar_lea.sflag [#allocation4], %s449
        %s451 = sand.u32 %s112, 1
        %s452 = smul.addr %s451, 64
        %s453 = scalar_lea.vmem [#allocation5], %s452
        // Predicated region
        $region37: #{tpu_custom_call.1} parent=31 // pred_check
          %p454 = pneg %p122
        $region38: #{tpu_custom_call.1} parent=31 // pred_check_branch
          %456 = sbr.rel (%p454) target = $region40
        $region39: #{tpu_custom_call.1} parent=31 // pred_region
          %s458 = ssub.s32 1024, 1024
          %459 = vsyncadd %s450, %s458
          %s460 = smul.addr %s24, 16
          %s461 = sadd.s32 %s25, %s460
          %s462 = smul.addr %s461, 128
          %s463 = scalar_lea.hbm %s3, %s462
          %s464 = sshll.u32 %s453, 4
          %s465 = int_to_ptr.vmem [resolvable:$true] %s464
          %470 = dma.vmem_to_hbm [thread:$0]  %s465, 1024, %s463, %s450, 128, 256, 8
        $region40: #{tpu_custom_call.1} parent=31 // pred_fallthru
          _
      $region32: #{tpu_custom_call.1} parent=5 // pred_fallthru
        _
      %p471 = scmp.le.s32.totalorder 2, %s15
      // Predicated region
      $region41: #{tpu_custom_call.1} parent=5 // pred_check
        %p472 = pneg %p471
      $region42: #{tpu_custom_call.1} parent=5 // pred_check_branch
        %474 = sbr.rel (%p472) target = $region44
      $region43: #{tpu_custom_call.1} parent=5 // pred_region
        %s475 = ssub.s32 %s15, 2
        // Predicated region
        $region45: #{tpu_custom_call.1} parent=43 // pred_check
          %p476 = pneg %p128
        $region46: #{tpu_custom_call.1} parent=43 // pred_check_branch
          %478 = sbr.rel (%p476) target = $region48
        $region47: #{tpu_custom_call.1} parent=43 // pred_region
          %s479 = sand.u32 %s113, 1
          %s480 = scalar_lea.sflag [#allocation4], %s479
          %s481 = sand.u32 %s113, 1
          %s482 = smul.addr %s481, 64
          %s483 = scalar_lea.vmem [#allocation5], %s482
          %484 = dma.done %s480, 1024
        $region48: #{tpu_custom_call.1} parent=43 // pred_fallthru
          _
      $region44: #{tpu_custom_call.1} parent=5 // pred_fallthru
        _
    $region6: #{tpu_custom_call.1} parent=1 // loop_footer
      %s19 = sadd.s32 1, %s15
    $region7: #{tpu_custom_call.1} parent=1 // loop_footer_branch
      %14 = sbr.rel target = $region3
    $region8: #{tpu_custom_call.1} parent=1 // loop_exit
      _
    %485 = vsyncpa [#allocation3], 1
    %s486 = scalar_lea.sflag [#allocation3], 1
    %487 = vsyncpa %s486, 1
    %488 = vsyncpa [#allocation4], 1
    %s489 = scalar_lea.sflag [#allocation4], 1
    %490 = vsyncpa %s489, 1

</llo_original>
